<compile_context>
chip_gen: v7x
topology: tpu7x:2x2x1
jax: 0.10.0
libtpu: 0.0.40
codegen_flags: <defaults>
</compile_context>

<pallas_src>
import jax
import jax.numpy as jnp
from jax.experimental import pallas as pl
from jax.experimental.pallas import tpu as pltpu

KH = KW = 5
PAD = 2
CIN = 3
COUT = 32
K_RAW = KH * KW * CIN      # 75 real contraction rows
K_PAD = 80                 # 75 taps + 1 bias row + 4 zero rows (80 % 8 == 0)


def _round_up(x, m):
    return ((x + m - 1) // m) * m


def _make_conv_kernel(tm, wp):
    """Kernel closure over tile length `tm` (mult of 128) and padded width `wp`."""

    def kernel(w_ref, x_ref, o_ref, patch_ref):
        # w_ref:     (COUT, K_PAD)      flattened 5x5x3 filters; column 75 = bias
        # x_ref:     (CIN, tm + padw)   halo'd window of the flat padded image
        # o_ref:     (COUT, tm)         lane-dense output tile (padded-width coords)
        # patch_ref: (K_PAD, tm)        im2col slab built in VMEM (static slices only)
        for kh in range(KH):
            for kw in range(KW):
                off = kh * wp + kw                      # static shift into the window
                k0 = (kh * KW + kw) * CIN               # static row group in the slab
                patch_ref[k0:k0 + CIN, :] = x_ref[:, off:off + tm]
        # Bias carrier row + explicit zero rows (scratch VMEM is uninitialized).
        patch_ref[K_RAW:K_RAW + 1, :] = jnp.ones((1, tm), jnp.float32)
        patch_ref[K_RAW + 1:K_PAD, :] = jnp.zeros((K_PAD - K_RAW - 1, tm), jnp.float32)
        # Single MXU matmul: (COUT, K_PAD) @ (K_PAD, tm).
        o_ref[...] = jnp.dot(
            w_ref[...], patch_ref[...], preferred_element_type=jnp.float32
        ).astype(o_ref.dtype)

    return kernel


def conv2d_pallas(x_nchw, weight_oihw, bias, *, tm_target=1024):
    """Conv2d(3, 32, kernel_size=5, padding=2, stride=1): (N,3,H,W) -> (N,32,H,W)."""
    N, C, H, W = x_nchw.shape
    assert C == CIN
    Hp, Wp = H + 2 * PAD, W + 2 * PAD
    l_out = H * Wp                              # per-image output length, padded-width coords
    halo = (KH - 1) * Wp + (KW - 1)             # largest static patch offset (4*Wp + 4)
    padw = _round_up(halo, 128)                 # halo appended to every window (lane aligned)

    tm = min(_round_up(tm_target, 128), _round_up(l_out, 128))
    m_tiles = pl.cdiv(l_out, tm)
    m_pad = m_tiles * tm
    l_flat = m_pad + padw                       # flat length each window may read up to

    # ---- cheap wrapper-side prep: NO im2col slab --------------------------------
    x_pad = jnp.pad(x_nchw, ((0, 0), (0, 0), (PAD, PAD), (PAD, PAD)))   # (N,C,Hp,Wp)
    x_flat = x_pad.reshape(N, CIN, Hp * Wp)                             # free reshape
    x_flat = jnp.pad(x_flat, ((0, 0), (0, 0), (0, l_flat - Hp * Wp)))   # zero tail
    # Overlapping halo'd windows (one fused slice/stack, ~1.2x input bytes) so the
    # kernel never needs a dynamic lane-dim slice.
    x_win = jnp.stack(
        [x_flat[:, :, m * tm: m * tm + tm + padw] for m in range(m_tiles)],
        axis=1)                                                         # (N, m_tiles, CIN, tm+padw)

    # Flatten PyTorch (CO,CI,KH,KW) weights once to (CO,75) in (kh,kw,c) order,
    # append the bias column at index 75, zero-pad K to 80.
    w_flat = jnp.transpose(weight_oihw, (0, 2, 3, 1)).reshape(COUT, K_RAW)
    w_full = jnp.concatenate(
        [w_flat,
         bias.reshape(COUT, 1),
         jnp.zeros((COUT, K_PAD - K_RAW - 1), w_flat.dtype)],
        axis=1)                                                         # (COUT, K_PAD)

    out_p = pl.pallas_call(
        _make_conv_kernel(tm, Wp),
        out_shape=jax.ShapeDtypeStruct((N, COUT, m_pad), jnp.float32),
        grid_spec=pltpu.PrefetchScalarGridSpec(
            num_scalar_prefetch=0,
            grid=(N, m_tiles),
            in_specs=[
                pl.BlockSpec((COUT, K_PAD), lambda n, m: (0, 0)),                 # weights, resident
                pl.BlockSpec((None, None, CIN, tm + padw), lambda n, m: (n, m, 0, 0)),
            ],
            out_specs=pl.BlockSpec((None, COUT, tm), lambda n, m: (n, 0, m)),
            scratch_shapes=[pltpu.VMEM((K_PAD, tm), jnp.float32)],
        ),
        compiler_params=pltpu.CompilerParams(
            dimension_semantics=("parallel", "parallel"),
        ),
    )(w_full, x_win)

    # Kernel output is already NCHW-ordered; just drop padded-width garbage columns.
    out = out_p[:, :, :l_out].reshape(N, COUT, H, Wp)[:, :, :, :W]
    return out


def init_params(key):
    """Deterministic init mimicking nn.Conv2d defaults (kaiming-uniform bounds)."""
    kw_key, kb_key = jax.random.split(key)
    fan_in = CIN * KH * KW
    bound = 1.0 / jnp.sqrt(fan_in)
    weight = jax.random.uniform(
        kw_key, (COUT, CIN, KH, KW), jnp.float32, minval=-bound, maxval=bound
    )
    bias = jax.random.uniform(
        kb_key, (COUT,), jnp.float32, minval=-bound, maxval=bound
    )
    return weight, bias


if __name__ == "__main__":
    key = jax.random.PRNGKey(0)
    k_x, k_p = jax.random.split(key)

    N, H, W = 2, 16, 16
    x = jax.random.normal(k_x, (N, CIN, H, W), jnp.float32)
    weight, bias = init_params(k_p)

    conv_fn = jax.jit(conv2d_pallas)
    out = jax.block_until_ready(conv_fn(x, weight, bias))

    # Reference check against XLA conv (same NCHW/OIHW semantics as PyTorch).
    ref = jax.lax.conv_general_dilated(
        x, weight, window_strides=(1, 1),
        padding=((PAD, PAD), (PAD, PAD)),
        dimension_numbers=("NCHW", "OIHW", "NCHW"),
    ) + bias.reshape(1, COUT, 1, 1)
    assert out.shape == (N, COUT, H, W)
    assert jnp.allclose(out, ref, atol=1e-4, rtol=1e-4)

    print("KERNEL_OK")
</pallas_src>

<mosaic_0001>
module attributes {stable_mosaic.version = 11 : i64} {
  func.func @kernel(%arg0: i32, %arg1: i32, %arg2: memref<32x80xf32, #tpu.memory_space<vmem>>, %arg3: memref<1x1x3x512xf32, #tpu.memory_space<vmem>>, %arg4: memref<1x32x384xf32, #tpu.memory_space<vmem>>, %arg5: memref<80x384xf32, #tpu.memory_space<vmem>>) attributes {dimension_semantics = [#tpu.dimension_semantics<parallel>, #tpu.dimension_semantics<parallel>], iteration_bounds = array<i64: 2, 1>, scalar_prefetch = 0 : i64, scratch_operands = 1 : i64, tpu.core_type = #tpu.core_type<tc>, window_params = [{pipeline_mode = #tpu.pipeline_mode<synchronous>, transform_indices = @transform_0, window_bounds = array<i64: 32, 80>}, {transform_indices = @transform_1, window_bounds = array<i64: 1, 1, 3, 512>}, {transform_indices = @transform_2, window_bounds = array<i64: 1, 32, 384>}]} {
    %c0 = arith.constant 0 : index
    %c0_0 = arith.constant 0 : index
    %c0_1 = arith.constant 0 : index
    %c0_2 = arith.constant 0 : index
    %0 = vector.load %arg3[%c0, %c0_0, %c0_1, %c0_2] : memref<1x1x3x512xf32, #tpu.memory_space<vmem>>, vector<1x1x3x384xf32>
    %1 = vector.shape_cast %0 : vector<1x1x3x384xf32> to vector<3x384xf32>
    %c0_3 = arith.constant 0 : index
    %c0_4 = arith.constant 0 : index
    %2 = vector.load %arg5[%c0_3, %c0_4] : memref<80x384xf32, #tpu.memory_space<vmem>>, vector<3x384xf32>
    tpu.vector_store %arg5[%c0_3, %c0_4], %1 {strides = array<i32>} : memref<80x384xf32, #tpu.memory_space<vmem>>, vector<3x384xf32>,
    %c0_5 = arith.constant 0 : index
    %c0_6 = arith.constant 0 : index
    %c0_7 = arith.constant 0 : index
    %c1 = arith.constant 1 : index
    %3 = vector.load %arg3[%c0_5, %c0_6, %c0_7, %c1] : memref<1x1x3x512xf32, #tpu.memory_space<vmem>>, vector<1x1x3x384xf32>
    %4 = vector.shape_cast %3 : vector<1x1x3x384xf32> to vector<3x384xf32>
    %c3 = arith.constant 3 : index
    %c0_8 = arith.constant 0 : index
    %5 = vector.load %arg5[%c3, %c0_8] : memref<80x384xf32, #tpu.memory_space<vmem>>, vector<3x384xf32>
    tpu.vector_store %arg5[%c3, %c0_8], %4 {strides = array<i32>} : memref<80x384xf32, #tpu.memory_space<vmem>>, vector<3x384xf32>,
    %c0_9 = arith.constant 0 : index
    %c0_10 = arith.constant 0 : index
    %c0_11 = arith.constant 0 : index
    %c2 = arith.constant 2 : index
    %6 = vector.load %arg3[%c0_9, %c0_10, %c0_11, %c2] : memref<1x1x3x512xf32, #tpu.memory_space<vmem>>, vector<1x1x3x384xf32>
    %7 = vector.shape_cast %6 : vector<1x1x3x384xf32> to vector<3x384xf32>
    %c6 = arith.constant 6 : index
    %c0_12 = arith.constant 0 : index
    %8 = vector.load %arg5[%c6, %c0_12] : memref<80x384xf32, #tpu.memory_space<vmem>>, vector<3x384xf32>
    tpu.vector_store %arg5[%c6, %c0_12], %7 {strides = array<i32>} : memref<80x384xf32, #tpu.memory_space<vmem>>, vector<3x384xf32>,
    %c0_13 = arith.constant 0 : index
    %c0_14 = arith.constant 0 : index
    %c0_15 = arith.constant 0 : index
    %c3_16 = arith.constant 3 : index
    %9 = vector.load %arg3[%c0_13, %c0_14, %c0_15, %c3_16] : memref<1x1x3x512xf32, #tpu.memory_space<vmem>>, vector<1x1x3x384xf32>
    %10 = vector.shape_cast %9 : vector<1x1x3x384xf32> to vector<3x384xf32>
    %c9 = arith.constant 9 : index
    %c0_17 = arith.constant 0 : index
    %11 = vector.load %arg5[%c9, %c0_17] : memref<80x384xf32, #tpu.memory_space<vmem>>, vector<3x384xf32>
    tpu.vector_store %arg5[%c9, %c0_17], %10 {strides = array<i32>} : memref<80x384xf32, #tpu.memory_space<vmem>>, vector<3x384xf32>,
    %c0_18 = arith.constant 0 : index
    %c0_19 = arith.constant 0 : index
    %c0_20 = arith.constant 0 : index
    %c4 = arith.constant 4 : index
    %12 = vector.load %arg3[%c0_18, %c0_19, %c0_20, %c4] : memref<1x1x3x512xf32, #tpu.memory_space<vmem>>, vector<1x1x3x384xf32>
    %13 = vector.shape_cast %12 : vector<1x1x3x384xf32> to vector<3x384xf32>
    %c12 = arith.constant 12 : index
    %c0_21 = arith.constant 0 : index
    %14 = vector.load %arg5[%c12, %c0_21] : memref<80x384xf32, #tpu.memory_space<vmem>>, vector<3x384xf32>
    tpu.vector_store %arg5[%c12, %c0_21], %13 {strides = array<i32>} : memref<80x384xf32, #tpu.memory_space<vmem>>, vector<3x384xf32>,
    %c0_22 = arith.constant 0 : index
    %c0_23 = arith.constant 0 : index
    %c0_24 = arith.constant 0 : index
    %c20 = arith.constant 20 : index
    %15 = vector.load %arg3[%c0_22, %c0_23, %c0_24, %c20] : memref<1x1x3x512xf32, #tpu.memory_space<vmem>>, vector<1x1x3x384xf32>
    %16 = vector.shape_cast %15 : vector<1x1x3x384xf32> to vector<3x384xf32>
    %c15 = arith.constant 15 : index
    %c0_25 = arith.constant 0 : index
    %17 = vector.load %arg5[%c15, %c0_25] : memref<80x384xf32, #tpu.memory_space<vmem>>, vector<3x384xf32>
    tpu.vector_store %arg5[%c15, %c0_25], %16 {strides = array<i32>} : memref<80x384xf32, #tpu.memory_space<vmem>>, vector<3x384xf32>,
    %c0_26 = arith.constant 0 : index
    %c0_27 = arith.constant 0 : index
    %c0_28 = arith.constant 0 : index
    %c21 = arith.constant 21 : index
    %18 = vector.load %arg3[%c0_26, %c0_27, %c0_28, %c21] : memref<1x1x3x512xf32, #tpu.memory_space<vmem>>, vector<1x1x3x384xf32>
    %19 = vector.shape_cast %18 : vector<1x1x3x384xf32> to vector<3x384xf32>
    %c18 = arith.constant 18 : index
    %c0_29 = arith.constant 0 : index
    %20 = vector.load %arg5[%c18, %c0_29] : memref<80x384xf32, #tpu.memory_space<vmem>>, vector<3x384xf32>
    tpu.vector_store %arg5[%c18, %c0_29], %19 {strides = array<i32>} : memref<80x384xf32, #tpu.memory_space<vmem>>, vector<3x384xf32>,
    %c0_30 = arith.constant 0 : index
    %c0_31 = arith.constant 0 : index
    %c0_32 = arith.constant 0 : index
    %c22 = arith.constant 22 : index
    %21 = vector.load %arg3[%c0_30, %c0_31, %c0_32, %c22] : memref<1x1x3x512xf32, #tpu.memory_space<vmem>>, vector<1x1x3x384xf32>
    %22 = vector.shape_cast %21 : vector<1x1x3x384xf32> to vector<3x384xf32>
    %c21_33 = arith.constant 21 : index
    %c0_34 = arith.constant 0 : index
    %23 = vector.load %arg5[%c21_33, %c0_34] : memref<80x384xf32, #tpu.memory_space<vmem>>, vector<3x384xf32>
    tpu.vector_store %arg5[%c21_33, %c0_34], %22 {strides = array<i32>} : memref<80x384xf32, #tpu.memory_space<vmem>>, vector<3x384xf32>,
    %c0_35 = arith.constant 0 : index
    %c0_36 = arith.constant 0 : index
    %c0_37 = arith.constant 0 : index
    %c23 = arith.constant 23 : index
    %24 = vector.load %arg3[%c0_35, %c0_36, %c0_37, %c23] : memref<1x1x3x512xf32, #tpu.memory_space<vmem>>, vector<1x1x3x384xf32>
    %25 = vector.shape_cast %24 : vector<1x1x3x384xf32> to vector<3x384xf32>
    %c24 = arith.constant 24 : index
    %c0_38 = arith.constant 0 : index
    %26 = vector.load %arg5[%c24, %c0_38] : memref<80x384xf32, #tpu.memory_space<vmem>>, vector<3x384xf32>
    tpu.vector_store %arg5[%c24, %c0_38], %25 {strides = array<i32>} : memref<80x384xf32, #tpu.memory_space<vmem>>, vector<3x384xf32>,
    %c0_39 = arith.constant 0 : index
    %c0_40 = arith.constant 0 : index
    %c0_41 = arith.constant 0 : index
    %c24_42 = arith.constant 24 : index
    %27 = vector.load %arg3[%c0_39, %c0_40, %c0_41, %c24_42] : memref<1x1x3x512xf32, #tpu.memory_space<vmem>>, vector<1x1x3x384xf32>
    %28 = vector.shape_cast %27 : vector<1x1x3x384xf32> to vector<3x384xf32>
    %c27 = arith.constant 27 : index
    %c0_43 = arith.constant 0 : index
    %29 = vector.load %arg5[%c27, %c0_43] : memref<80x384xf32, #tpu.memory_space<vmem>>, vector<3x384xf32>
    tpu.vector_store %arg5[%c27, %c0_43], %28 {strides = array<i32>} : memref<80x384xf32, #tpu.memory_space<vmem>>, vector<3x384xf32>,
    %c0_44 = arith.constant 0 : index
    %c0_45 = arith.constant 0 : index
    %c0_46 = arith.constant 0 : index
    %c40 = arith.constant 40 : index
    %30 = vector.load %arg3[%c0_44, %c0_45, %c0_46, %c40] : memref<1x1x3x512xf32, #tpu.memory_space<vmem>>, vector<1x1x3x384xf32>
    %31 = vector.shape_cast %30 : vector<1x1x3x384xf32> to vector<3x384xf32>
    %c30 = arith.constant 30 : index
    %c0_47 = arith.constant 0 : index
    %32 = vector.load %arg5[%c30, %c0_47] : memref<80x384xf32, #tpu.memory_space<vmem>>, vector<3x384xf32>
    tpu.vector_store %arg5[%c30, %c0_47], %31 {strides = array<i32>} : memref<80x384xf32, #tpu.memory_space<vmem>>, vector<3x384xf32>,
    %c0_48 = arith.constant 0 : index
    %c0_49 = arith.constant 0 : index
    %c0_50 = arith.constant 0 : index
    %c41 = arith.constant 41 : index
    %33 = vector.load %arg3[%c0_48, %c0_49, %c0_50, %c41] : memref<1x1x3x512xf32, #tpu.memory_space<vmem>>, vector<1x1x3x384xf32>
    %34 = vector.shape_cast %33 : vector<1x1x3x384xf32> to vector<3x384xf32>
    %c33 = arith.constant 33 : index
    %c0_51 = arith.constant 0 : index
    %35 = vector.load %arg5[%c33, %c0_51] : memref<80x384xf32, #tpu.memory_space<vmem>>, vector<3x384xf32>
    tpu.vector_store %arg5[%c33, %c0_51], %34 {strides = array<i32>} : memref<80x384xf32, #tpu.memory_space<vmem>>, vector<3x384xf32>,
    %c0_52 = arith.constant 0 : index
    %c0_53 = arith.constant 0 : index
    %c0_54 = arith.constant 0 : index
    %c42 = arith.constant 42 : index
    %36 = vector.load %arg3[%c0_52, %c0_53, %c0_54, %c42] : memref<1x1x3x512xf32, #tpu.memory_space<vmem>>, vector<1x1x3x384xf32>
    %37 = vector.shape_cast %36 : vector<1x1x3x384xf32> to vector<3x384xf32>
    %c36 = arith.constant 36 : index
    %c0_55 = arith.constant 0 : index
    %38 = vector.load %arg5[%c36, %c0_55] : memref<80x384xf32, #tpu.memory_space<vmem>>, vector<3x384xf32>
    tpu.vector_store %arg5[%c36, %c0_55], %37 {strides = array<i32>} : memref<80x384xf32, #tpu.memory_space<vmem>>, vector<3x384xf32>,
    %c0_56 = arith.constant 0 : index
    %c0_57 = arith.constant 0 : index
    %c0_58 = arith.constant 0 : index
    %c43 = arith.constant 43 : index
    %39 = vector.load %arg3[%c0_56, %c0_57, %c0_58, %c43] : memref<1x1x3x512xf32, #tpu.memory_space<vmem>>, vector<1x1x3x384xf32>
    %40 = vector.shape_cast %39 : vector<1x1x3x384xf32> to vector<3x384xf32>
    %c39 = arith.constant 39 : index
    %c0_59 = arith.constant 0 : index
    %41 = vector.load %arg5[%c39, %c0_59] : memref<80x384xf32, #tpu.memory_space<vmem>>, vector<3x384xf32>
    tpu.vector_store %arg5[%c39, %c0_59], %40 {strides = array<i32>} : memref<80x384xf32, #tpu.memory_space<vmem>>, vector<3x384xf32>,
    %c0_60 = arith.constant 0 : index
    %c0_61 = arith.constant 0 : index
    %c0_62 = arith.constant 0 : index
    %c44 = arith.constant 44 : index
    %42 = vector.load %arg3[%c0_60, %c0_61, %c0_62, %c44] : memref<1x1x3x512xf32, #tpu.memory_space<vmem>>, vector<1x1x3x384xf32>
    %43 = vector.shape_cast %42 : vector<1x1x3x384xf32> to vector<3x384xf32>
    %c42_63 = arith.constant 42 : index
    %c0_64 = arith.constant 0 : index
    %44 = vector.load %arg5[%c42_63, %c0_64] : memref<80x384xf32, #tpu.memory_space<vmem>>, vector<3x384xf32>
    tpu.vector_store %arg5[%c42_63, %c0_64], %43 {strides = array<i32>} : memref<80x384xf32, #tpu.memory_space<vmem>>, vector<3x384xf32>,
    %c0_65 = arith.constant 0 : index
    %c0_66 = arith.constant 0 : index
    %c0_67 = arith.constant 0 : index
    %c60 = arith.constant 60 : index
    %45 = vector.load %arg3[%c0_65, %c0_66, %c0_67, %c60] : memref<1x1x3x512xf32, #tpu.memory_space<vmem>>, vector<1x1x3x384xf32>
    %46 = vector.shape_cast %45 : vector<1x1x3x384xf32> to vector<3x384xf32>
    %c45 = arith.constant 45 : index
    %c0_68 = arith.constant 0 : index
    %47 = vector.load %arg5[%c45, %c0_68] : memref<80x384xf32, #tpu.memory_space<vmem>>, vector<3x384xf32>
    tpu.vector_store %arg5[%c45, %c0_68], %46 {strides = array<i32>} : memref<80x384xf32, #tpu.memory_space<vmem>>, vector<3x384xf32>,
    %c0_69 = arith.constant 0 : index
    %c0_70 = arith.constant 0 : index
    %c0_71 = arith.constant 0 : index
    %c61 = arith.constant 61 : index
    %48 = vector.load %arg3[%c0_69, %c0_70, %c0_71, %c61] : memref<1x1x3x512xf32, #tpu.memory_space<vmem>>, vector<1x1x3x384xf32>
    %49 = vector.shape_cast %48 : vector<1x1x3x384xf32> to vector<3x384xf32>
    %c48 = arith.constant 48 : index
    %c0_72 = arith.constant 0 : index
    %50 = vector.load %arg5[%c48, %c0_72] : memref<80x384xf32, #tpu.memory_space<vmem>>, vector<3x384xf32>
    tpu.vector_store %arg5[%c48, %c0_72], %49 {strides = array<i32>} : memref<80x384xf32, #tpu.memory_space<vmem>>, vector<3x384xf32>,
    %c0_73 = arith.constant 0 : index
    %c0_74 = arith.constant 0 : index
    %c0_75 = arith.constant 0 : index
    %c62 = arith.constant 62 : index
    %51 = vector.load %arg3[%c0_73, %c0_74, %c0_75, %c62] : memref<1x1x3x512xf32, #tpu.memory_space<vmem>>, vector<1x1x3x384xf32>
    %52 = vector.shape_cast %51 : vector<1x1x3x384xf32> to vector<3x384xf32>
    %c51 = arith.constant 51 : index
    %c0_76 = arith.constant 0 : index
    %53 = vector.load %arg5[%c51, %c0_76] : memref<80x384xf32, #tpu.memory_space<vmem>>, vector<3x384xf32>
    tpu.vector_store %arg5[%c51, %c0_76], %52 {strides = array<i32>} : memref<80x384xf32, #tpu.memory_space<vmem>>, vector<3x384xf32>,
    %c0_77 = arith.constant 0 : index
    %c0_78 = arith.constant 0 : index
    %c0_79 = arith.constant 0 : index
    %c63 = arith.constant 63 : index
    %54 = vector.load %arg3[%c0_77, %c0_78, %c0_79, %c63] : memref<1x1x3x512xf32, #tpu.memory_space<vmem>>, vector<1x1x3x384xf32>
    %55 = vector.shape_cast %54 : vector<1x1x3x384xf32> to vector<3x384xf32>
    %c54 = arith.constant 54 : index
    %c0_80 = arith.constant 0 : index
    %56 = vector.load %arg5[%c54, %c0_80] : memref<80x384xf32, #tpu.memory_space<vmem>>, vector<3x384xf32>
    tpu.vector_store %arg5[%c54, %c0_80], %55 {strides = array<i32>} : memref<80x384xf32, #tpu.memory_space<vmem>>, vector<3x384xf32>,
    %c0_81 = arith.constant 0 : index
    %c0_82 = arith.constant 0 : index
    %c0_83 = arith.constant 0 : index
    %c64 = arith.constant 64 : index
    %57 = vector.load %arg3[%c0_81, %c0_82, %c0_83, %c64] : memref<1x1x3x512xf32, #tpu.memory_space<vmem>>, vector<1x1x3x384xf32>
    %58 = vector.shape_cast %57 : vector<1x1x3x384xf32> to vector<3x384xf32>
    %c57 = arith.constant 57 : index
    %c0_84 = arith.constant 0 : index
    %59 = vector.load %arg5[%c57, %c0_84] : memref<80x384xf32, #tpu.memory_space<vmem>>, vector<3x384xf32>
    tpu.vector_store %arg5[%c57, %c0_84], %58 {strides = array<i32>} : memref<80x384xf32, #tpu.memory_space<vmem>>, vector<3x384xf32>,
    %c0_85 = arith.constant 0 : index
    %c0_86 = arith.constant 0 : index
    %c0_87 = arith.constant 0 : index
    %c80 = arith.constant 80 : index
    %60 = vector.load %arg3[%c0_85, %c0_86, %c0_87, %c80] : memref<1x1x3x512xf32, #tpu.memory_space<vmem>>, vector<1x1x3x384xf32>
    %61 = vector.shape_cast %60 : vector<1x1x3x384xf32> to vector<3x384xf32>
    %c60_88 = arith.constant 60 : index
    %c0_89 = arith.constant 0 : index
    %62 = vector.load %arg5[%c60_88, %c0_89] : memref<80x384xf32, #tpu.memory_space<vmem>>, vector<3x384xf32>
    tpu.vector_store %arg5[%c60_88, %c0_89], %61 {strides = array<i32>} : memref<80x384xf32, #tpu.memory_space<vmem>>, vector<3x384xf32>,
    %c0_90 = arith.constant 0 : index
    %c0_91 = arith.constant 0 : index
    %c0_92 = arith.constant 0 : index
    %c81 = arith.constant 81 : index
    %63 = vector.load %arg3[%c0_90, %c0_91, %c0_92, %c81] : memref<1x1x3x512xf32, #tpu.memory_space<vmem>>, vector<1x1x3x384xf32>
    %64 = vector.shape_cast %63 : vector<1x1x3x384xf32> to vector<3x384xf32>
    %c63_93 = arith.constant 63 : index
    %c0_94 = arith.constant 0 : index
    %65 = vector.load %arg5[%c63_93, %c0_94] : memref<80x384xf32, #tpu.memory_space<vmem>>, vector<3x384xf32>
    tpu.vector_store %arg5[%c63_93, %c0_94], %64 {strides = array<i32>} : memref<80x384xf32, #tpu.memory_space<vmem>>, vector<3x384xf32>,
    %c0_95 = arith.constant 0 : index
    %c0_96 = arith.constant 0 : index
    %c0_97 = arith.constant 0 : index
    %c82 = arith.constant 82 : index
    %66 = vector.load %arg3[%c0_95, %c0_96, %c0_97, %c82] : memref<1x1x3x512xf32, #tpu.memory_space<vmem>>, vector<1x1x3x384xf32>
    %67 = vector.shape_cast %66 : vector<1x1x3x384xf32> to vector<3x384xf32>
    %c66 = arith.constant 66 : index
    %c0_98 = arith.constant 0 : index
    %68 = vector.load %arg5[%c66, %c0_98] : memref<80x384xf32, #tpu.memory_space<vmem>>, vector<3x384xf32>
    tpu.vector_store %arg5[%c66, %c0_98], %67 {strides = array<i32>} : memref<80x384xf32, #tpu.memory_space<vmem>>, vector<3x384xf32>,
    %c0_99 = arith.constant 0 : index
    %c0_100 = arith.constant 0 : index
    %c0_101 = arith.constant 0 : index
    %c83 = arith.constant 83 : index
    %69 = vector.load %arg3[%c0_99, %c0_100, %c0_101, %c83] : memref<1x1x3x512xf32, #tpu.memory_space<vmem>>, vector<1x1x3x384xf32>
    %70 = vector.shape_cast %69 : vector<1x1x3x384xf32> to vector<3x384xf32>
    %c69 = arith.constant 69 : index
    %c0_102 = arith.constant 0 : index
    %71 = vector.load %arg5[%c69, %c0_102] : memref<80x384xf32, #tpu.memory_space<vmem>>, vector<3x384xf32>
    tpu.vector_store %arg5[%c69, %c0_102], %70 {strides = array<i32>} : memref<80x384xf32, #tpu.memory_space<vmem>>, vector<3x384xf32>,
    %c0_103 = arith.constant 0 : index
    %c0_104 = arith.constant 0 : index
    %c0_105 = arith.constant 0 : index
    %c84 = arith.constant 84 : index
    %72 = vector.load %arg3[%c0_103, %c0_104, %c0_105, %c84] : memref<1x1x3x512xf32, #tpu.memory_space<vmem>>, vector<1x1x3x384xf32>
    %73 = vector.shape_cast %72 : vector<1x1x3x384xf32> to vector<3x384xf32>
    %c72 = arith.constant 72 : index
    %c0_106 = arith.constant 0 : index
    %74 = vector.load %arg5[%c72, %c0_106] : memref<80x384xf32, #tpu.memory_space<vmem>>, vector<3x384xf32>
    tpu.vector_store %arg5[%c72, %c0_106], %73 {strides = array<i32>} : memref<80x384xf32, #tpu.memory_space<vmem>>, vector<3x384xf32>,
    %cst = arith.constant 1.000000e+00 : f32
    %75 = vector.broadcast %cst : f32 to vector<1x384xf32>
    %c75 = arith.constant 75 : index
    %c0_107 = arith.constant 0 : index
    %76 = vector.load %arg5[%c75, %c0_107] : memref<80x384xf32, #tpu.memory_space<vmem>>, vector<1x384xf32>
    tpu.vector_store %arg5[%c75, %c0_107], %75 {strides = array<i32>} : memref<80x384xf32, #tpu.memory_space<vmem>>, vector<1x384xf32>,
    %cst_108 = arith.constant 0.000000e+00 : f32
    %77 = vector.broadcast %cst_108 : f32 to vector<4x384xf32>
    %c76 = arith.constant 76 : index
    %c0_109 = arith.constant 0 : index
    %78 = vector.load %arg5[%c76, %c0_109] : memref<80x384xf32, #tpu.memory_space<vmem>>, vector<4x384xf32>
    tpu.vector_store %arg5[%c76, %c0_109], %77 {strides = array<i32>} : memref<80x384xf32, #tpu.memory_space<vmem>>, vector<4x384xf32>,
    %c0_110 = arith.constant 0 : index
    %c0_111 = arith.constant 0 : index
    %79 = vector.load %arg2[%c0_110, %c0_111] : memref<32x80xf32, #tpu.memory_space<vmem>>, vector<32x80xf32>
    %c0_112 = arith.constant 0 : index
    %c0_113 = arith.constant 0 : index
    %80 = vector.load %arg5[%c0_112, %c0_113] : memref<80x384xf32, #tpu.memory_space<vmem>>, vector<80x384xf32>
    %cst_114 = arith.constant dense<0.000000e+00> : vector<32x384xf32>
    %81 = tpu.matmul %79, %80, %cst_114 {dimension_numbers = #tpu.dot_dimension_numbers<[1], [0], [0], [1], [0, 0, 1, 1], [], []>} : vector<32x80xf32>, vector<80x384xf32>, vector<32x384xf32> -> vector<32x384xf32>
    %c0_115 = arith.constant 0 : index
    %c0_116 = arith.constant 0 : index
    %c0_117 = arith.constant 0 : index
    %82 = vector.load %arg4[%c0_115, %c0_116, %c0_117] : memref<1x32x384xf32, #tpu.memory_space<vmem>>, vector<1x32x384xf32>
    %83 = vector.shape_cast %82 : vector<1x32x384xf32> to vector<32x384xf32>
    %84 = vector.shape_cast %81 : vector<32x384xf32> to vector<1x32x384xf32>
    tpu.vector_store %arg4[%c0_115, %c0_116, %c0_117], %84 {strides = array<i32>} : memref<1x32x384xf32, #tpu.memory_space<vmem>>, vector<1x32x384xf32>,
    return
  }
  func.func @transform_0(%arg0: i32, %arg1: i32) -> (i32, i32) {
    %c0_i32 = arith.constant 0 : i32
    %c0_i32_0 = arith.constant 0 : i32
    %c0_i32_1 = arith.constant 0 : i32
    return %c0_i32, %c0_i32_0 : i32, i32
  }
  func.func @transform_1(%arg0: i32, %arg1: i32) -> (i32, i32, i32, i32) {
    %c0_i32 = arith.constant 0 : i32
    %c0_i32_0 = arith.constant 0 : i32
    %c0_i32_1 = arith.constant 0 : i32
    return %arg0, %arg1, %c0_i32, %c0_i32_0 : i32, i32, i32, i32
  }
  func.func @transform_2(%arg0: i32, %arg1: i32) -> (i32, i32, i32) {
    %c0_i32 = arith.constant 0 : i32
    %c0_i32_0 = arith.constant 0 : i32
    return %arg0, %c0_i32, %arg1 : i32, i32, i32
  }
}

</mosaic_0001>

<llo_original>
// kernel: conv2d_pallas.1
$region0: #{conv2d_pallas.1}
  #allocation0 [shape = 'u32[]', space=smem, size = 0x4, offset = 0x4, fixed_abs, tag = 'smem constant byte address 0x4 - core index']
  #allocation1 [shape = 'u32[144,128]{1,0:T(1,128)}', space=vmem, size = 0x12000, scoped, tag = 'internal scratch']
  #allocation2 [shape = 'f32[80,384]{1,0:T(8,128)}', space=vmem, size = 0x1e000, scoped, tag = 'scratch operand']
  %s0 = inlined_call_operand.vmem [shape: f32[32,80], index: 0, kind: input, shape index: {}]
  %s1 = inlined_call_operand.vmem [shape: f32[2,1,3,512], index: 1, kind: input, shape index: {}]
  %s2 = inlined_call_operand.vmem [shape: f32[2,32,384], index: 2, kind: output, shape index: {}]
  %s3 = sld [smem:[#allocation0]]
  $region41: #{conv2d_pallas.1} parent=0
    _
  %s5 = ssub.s32 1, %s3
  %s6 = scalar_select 0, %s5, %s3
  loop: start=0, step=1, limit=4
  $region2: #{conv2d_pallas.1} parent=0 // loop_pre_header
    _
  $region3: #{conv2d_pallas.1} parent=0 // loop_header
    %s8 = sphi 0, %s12
    %p9 = scmp.ge.s32.totalorder %s8, 4
    %s15 = sphi 0, %s27
    %s16 = sphi 0, %s23
    %s17 = sphi 0, %s15
    %s18 = sphi 0, %s16
    %s19 = sphi 0, %s17
    %s20 = sphi 0, %s18
    %s28 = sphi 0, %s28
    %s30 = sphi 0, %s28
    %s31 = sphi 0, %s30
    %s45 = sphi 0, %s31
    %s53 = sphi 0, %s55
    %s56 = sphi 0, %s53
    %s57 = sphi 0, %s56
    %s73 = sphi 0, %s57
    %s81 = sphi 0, %s83
    %s84 = sphi 0, %s81
    %s85 = sphi 0, %s84
    %s101 = sphi 0, %s85
  $region4: #{conv2d_pallas.1} parent=0 // loop_header_branch
    %11 = sbr.rel (%p9) target = $region8
  $region5: #{conv2d_pallas.1} parent=0 // loop_body
    %s13 = ssub.s32 %s8, 1
    %s14 = ssub.s32 %s8, 2
    %s21 = sadd.s32 1, %s16
    %p22 = scmp.ge.s32.totalorder %s21, 1
    %s23 = scalar_select %p22, 0, %s21
    %s24 = sadd.s32 1, %s15
    %s25 = scalar_select %p22, %s24, %s15
    %p26 = scmp.ge.s32.totalorder %s25, 2
    %s27 = scalar_select %p26, 0, %s25
    %s29 = sadd.s32 %s28, 1
    %p32 = scmp.eq.s32.totalorder %s8, 1
    %p33 = scmp.ne.s32.totalorder %s28, %s30
    %p34 = scmp.eq.s32.totalorder %s8, 0
    %p35 = por %p33, %p34
    %p36 = scmp.ne.s32.totalorder %s28, %s30
    %p37 = scmp.eq.s32.totalorder %s13, 1
    %p38 = por %p36, %p37
    %p39 = scmp.ne.s32.totalorder %s30, %s31
    %p40 = scmp.eq.s32.totalorder %s13, 0
    %p41 = por %p39, %p40
    %p42 = scmp.ne.s32.totalorder %s30, %s31
    %p43 = scmp.eq.s32.totalorder %s14, 1
    %p44 = por %p42, %p43
    %p46 = scmp.ne.s32.totalorder %s31, %s45
    %p47 = scmp.eq.s32.totalorder %s14, 0
    %p48 = por %p46, %p47
    %s49 = ssub.s32 %s15, %s27
    %s50 = ssub.s32 %s16, %s23
    %s51 = sor.u32 %s49, %s50
    %p52 = scmp.eq.s32.totalorder %s51, 0
    %s54 = sadd.s32 %s53, 1
    %s55 = scalar_select %p52, %s53, %s54
    %p58 = pneg %p52
    %p59 = scmp.eq.s32.totalorder %s8, 1
    %p60 = por %p58, %p59
    %p61 = scmp.ne.s32.totalorder %s53, %s56
    %p62 = scmp.eq.s32.totalorder %s8, 0
    %p63 = por %p61, %p62
    %p64 = scmp.ne.s32.totalorder %s53, %s56
    %p65 = scmp.eq.s32.totalorder %s13, 1
    %p66 = por %p64, %p65
    %p67 = scmp.ne.s32.totalorder %s56, %s57
    %p68 = scmp.eq.s32.totalorder %s13, 0
    %p69 = por %p67, %p68
    %p70 = scmp.ne.s32.totalorder %s56, %s57
    %p71 = scmp.eq.s32.totalorder %s14, 1
    %p72 = por %p70, %p71
    %p74 = scmp.ne.s32.totalorder %s57, %s73
    %p75 = scmp.eq.s32.totalorder %s14, 0
    %p76 = por %p74, %p75
    %s77 = ssub.s32 %s15, %s27
    %s78 = ssub.s32 %s16, %s23
    %s79 = sor.u32 %s77, %s78
    %p80 = scmp.eq.s32.totalorder %s79, 0
    %s82 = sadd.s32 %s81, 1
    %s83 = scalar_select %p80, %s81, %s82
    %p86 = pneg %p80
    %p87 = scmp.eq.s32.totalorder %s8, 1
    %p88 = por %p86, %p87
    %p89 = scmp.ne.s32.totalorder %s81, %s84
    %p90 = scmp.eq.s32.totalorder %s8, 0
    %p91 = por %p89, %p90
    %p92 = scmp.ne.s32.totalorder %s81, %s84
    %p93 = scmp.eq.s32.totalorder %s13, 1
    %p94 = por %p92, %p93
    %p95 = scmp.ne.s32.totalorder %s84, %s85
    %p96 = scmp.eq.s32.totalorder %s13, 0
    %p97 = por %p95, %p96
    %p98 = scmp.ne.s32.totalorder %s84, %s85
    %p99 = scmp.eq.s32.totalorder %s14, 1
    %p100 = por %p98, %p99
    %p102 = scmp.ne.s32.totalorder %s85, %s101
    %p103 = scmp.eq.s32.totalorder %s14, 0
    %p104 = por %p102, %p103
    %p105 = scmp.le.s32.totalorder 1, %s8
    %p106 = scmp.lt.s32.totalorder %s8, 3
    %p107 = pnand %p105, %p106
    %p108 = pneg %p107
    // Predicated region
    $region9: #{conv2d_pallas.1} parent=5 // pred_check
      _
    $region10: #{conv2d_pallas.1} parent=5 // pred_check_branch
      %110 = sbr.rel (%p107) target = $region12
    $region11: #{conv2d_pallas.1} parent=5 // pred_region
      %s111 = ssub.s32 %s8, 1
      // Predicated region
      $region13: #{conv2d_pallas.1} parent=11 // pred_check
        %p112 = pneg %p41
      $region14: #{conv2d_pallas.1} parent=11 // pred_check_branch
        %114 = sbr.rel (%p112) target = $region16
      $region15: #{conv2d_pallas.1} parent=11 // pred_region
        _
      $region16: #{conv2d_pallas.1} parent=11 // pred_fallthru
        _
    $region12: #{conv2d_pallas.1} parent=5 // pred_fallthru
      _
    %p115 = scmp.lt.s32.totalorder %s8, 2
    // Predicated region
    $region17: #{conv2d_pallas.1} parent=5 // pred_check
      %p116 = pneg %p115
    $region18: #{conv2d_pallas.1} parent=5 // pred_check_branch
      %118 = sbr.rel (%p116) target = $region20
    $region19: #{conv2d_pallas.1} parent=5 // pred_region
      // Predicated region
      $region21: #{conv2d_pallas.1} parent=19 // pred_check
        %p119 = pneg %p63
      $region22: #{conv2d_pallas.1} parent=19 // pred_check_branch
        %121 = sbr.rel (%p119) target = $region24
      $region23: #{conv2d_pallas.1} parent=19 // pred_region
        %p122 = scmp.lt.s32.totalorder %s15, 1
        %s123 = scalar_select %p122, %s15, 1
        %p124 = scmp.lt.s32.totalorder %s16, 0
        %s125 = scalar_select %p124, %s16, 0
        %s126 = smul.addr %s125, 4
        %s127 = smul.addr %s123, 4
        %s128 = sadd.s32 %s126, %s127
        %s129 = smul.addr %s128, 4
        %s130 = scalar_lea.vmem %s1, %s129
      $region24: #{conv2d_pallas.1} parent=19 // pred_fallthru
        _
    $region20: #{conv2d_pallas.1} parent=5 // pred_fallthru
      _
    %p131 = scmp.le.s32.totalorder 1, %s8
    %p132 = scmp.lt.s32.totalorder %s8, 3
    %p133 = pnand %p131, %p132
    %p134 = pneg %p133
    // Predicated region
    $region25: #{conv2d_pallas.1} parent=5 // pred_check
      _
    $region26: #{conv2d_pallas.1} parent=5 // pred_check_branch
      %136 = sbr.rel (%p133) target = $region28
    $region27: #{conv2d_pallas.1} parent=5 // pred_region
      %s137 = ssub.s32 %s8, 1
      %p138 = pneg %p41
      %p139 = pneg %p38
      %p140 = scmp.lt.s32.totalorder %s17, 1
      %s141 = scalar_select %p140, %s17, 1
      %p142 = scmp.lt.s32.totalorder %s18, 0
      %s143 = scalar_select %p142, %s18, 0
      %s144 = smul.addr %s143, 4
      %s145 = smul.addr %s141, 4
      %s146 = sadd.s32 %s144, %s145
      %s147 = smul.addr %s146, 4
      %s148 = scalar_lea.vmem %s1, %s147
      %p149 = pneg %p69
      %p150 = pneg %p66
      %p151 = pneg %p97
      %p152 = pneg %p94
      %s153 = smul.u32 3, %s18
      %p154 = scmp.lt.s32.totalorder %s17, 1
      %s155 = scalar_select %p154, %s17, 1
      %p156 = scmp.lt.s32.totalorder %s153, 2
      %s157 = scalar_select %p156, %s153, 2
      %s158 = smul.addr %s155, 12
      %s159 = sadd.s32 %s157, %s158
      %s160 = smul.addr %s159, 8
      %s161 = scalar_lea.vmem %s2, %s160
      %p162 = scmp.lt.s32.totalorder %s17, 1
      %s163 = scalar_select %p162, %s17, 1
      %p164 = scmp.lt.s32.totalorder %s18, 0
      %s165 = scalar_select %p164, %s18, 0
      %s166 = smul.addr %s165, 4
      %s167 = smul.addr %s163, 4
      %s168 = sadd.s32 %s166, %s167
      %s169 = smul.addr %s168, 4
      %s170 = scalar_lea.vmem %s1, %s169
      %s171 = smul.u32 3, %s18
      %p172 = scmp.lt.s32.totalorder %s17, 1
      %s173 = scalar_select %p172, %s17, 1
      %p174 = scmp.lt.s32.totalorder %s171, 2
      %s175 = scalar_select %p174, %s171, 2
      %s176 = smul.addr %s173, 12
      %s177 = sadd.s32 %s175, %s176
      %s178 = smul.addr %s177, 8
      %s179 = scalar_lea.vmem %s2, %s178
      %s180 = smul.u32 3, %s18
      %v181 = vld [vmem:[%s170] sm:$0x77]
      %v182 = vld [vmem:[%s170 + $0x8] sm:$0x7]
      %v184 = vcombine.high %v181, %v181
      %186 = vst [vmem:[#allocation2] sm:$0x7] %v181
      %187 = vst [vmem:[#allocation2 + $0x8] sm:$0x7] %v184
      %188 = vst [vmem:[#allocation2 + $0x10] sm:$0x7] %v182
      %v189 = vld [vmem:[%s170] sm:$0x77]
      %v190 = vld [vmem:[%s170 + $0x8] sm:$0x77]
      %v193 = vcombine.high %v189, %v189
      %v194 = vcombine.high %v190, %v190
      %v195 = vrot.slane %v189, 5
      %v196 = vrot.slane %v193, 5
      %v197 = vrot.slane %v190, 5
      %v198 = vrot.slane %v194, 5
      %199 = vrot.lane.b32.xlu0 %v195, 127
      %v200 = vpop.permute.xlu0 %199
      %201 = vrot.lane.b32.xlu0 %v196, 127
      %v202 = vpop.permute.xlu0 %201
      %203 = vrot.lane.b32.xlu0 %v197, 127
      %v204 = vpop.permute.xlu0 %203
      %205 = vrot.lane.b32.xlu0 %v198, 127
      %v206 = vpop.permute.xlu0 %205
      %vm207 = vcmask 1039360
      %v208 = vsel %vm207, %v200, %v202
      %v209 = vsel %vm207, %v202, %v204
      %v210 = vsel %vm207, %v204, %v206
      %214 = vst [vmem:[#allocation2] sm:$0x38] %v208
      %215 = vst [vmem:[#allocation2 + $0x8] sm:$0x38] %v209
      %216 = vst [vmem:[#allocation2 + $0x10] sm:$0x38] %v210
      %v217 = vld [vmem:[%s170] sm:$0x77]
      %v218 = vld [vmem:[%s170 + $0x8] sm:$0x77]
      %v221 = vcombine.high %v217, %v217
      %v222 = vcombine.high %v218, %v218
      %v223 = vrot.slane %v217, 2
      %v224 = vrot.slane %v221, 2
      %v225 = vrot.slane %v218, 2
      %v226 = vrot.slane %v222, 2
      %227 = vrot.lane.b32.xlu0 %v223, 126
      %v228 = vpop.permute.xlu0 %227
      %229 = vrot.lane.b32.xlu0 %v224, 126
      %v230 = vpop.permute.xlu0 %229
      %231 = vrot.lane.b32.xlu0 %v225, 126
      %v232 = vpop.permute.xlu0 %231
      %233 = vrot.lane.b32.xlu0 %v226, 126
      %v234 = vpop.permute.xlu0 %233
      %vm235 = vcmask 1031168
      %v236 = vsel %vm235, %v228, %v230
      %v237 = vsel %vm235, %v230, %v232
      %v238 = vsel %vm235, %v232, %v234
      %242 = vst [vmem:[#allocation2] sm:$0xc0] %v236
      %243 = vst [vmem:[#allocation2 + $0x8] sm:$0xc0] %v237
      %244 = vst [vmem:[#allocation2 + $0x10] sm:$0xc0] %v238
      %245 = vst [vmem:[#allocation2 + $0x18] sm:$0x1] %v236
      %246 = vst [vmem:[#allocation2 + $0x20] sm:$0x1] %v237
      %247 = vst [vmem:[#allocation2 + $0x28] sm:$0x1] %v238
      %v248 = vld [vmem:[%s170] sm:$0x77]
      %v249 = vld [vmem:[%s170 + $0x8] sm:$0x77]
      %v252 = vcombine.high %v248, %v248
      %v253 = vcombine.high %v249, %v249
      %v254 = vrot.slane %v248, 7
      %v255 = vrot.slane %v252, 7
      %v256 = vrot.slane %v249, 7
      %v257 = vrot.slane %v253, 7
      %258 = vrot.lane.b32.xlu0 %v254, 125
      %v259 = vpop.permute.xlu0 %258
      %260 = vrot.lane.b32.xlu0 %v255, 125
      %v261 = vpop.permute.xlu0 %260
      %262 = vrot.lane.b32.xlu0 %v256, 125
      %v263 = vpop.permute.xlu0 %262
      %264 = vrot.lane.b32.xlu0 %v257, 125
      %v265 = vpop.permute.xlu0 %264
      %vm266 = vcmask 1022976
      %v267 = vsel %vm266, %v259, %v261
      %v268 = vsel %vm266, %v261, %v263
      %v269 = vsel %vm266, %v263, %v265
      %273 = vst [vmem:[#allocation2 + $0x18] sm:$0xe] %v267
      %274 = vst [vmem:[#allocation2 + $0x20] sm:$0xe] %v268
      %275 = vst [vmem:[#allocation2 + $0x28] sm:$0xe] %v269
      %v276 = vld [vmem:[%s170] sm:$0x77]
      %v277 = vld [vmem:[%s170 + $0x8] sm:$0x77]
      %v280 = vcombine.low %v276, %v276
      %v281 = vcombine.low %v277, %v277
      %282 = vrot.lane.b32.xlu0 %v280, 124
      %v283 = vpop.permute.xlu0 %282
      %284 = vrot.lane.b32.xlu0 %v276, 124
      %v285 = vpop.permute.xlu0 %284
      %286 = vrot.lane.b32.xlu0 %v281, 124
      %v287 = vpop.permute.xlu0 %286
      %288 = vrot.lane.b32.xlu0 %v277, 124
      %v289 = vpop.permute.xlu0 %288
      %vm290 = vcmask 1014784
      %v291 = vsel %vm290, %v283, %v285
      %v292 = vsel %vm290, %v285, %v287
      %v293 = vsel %vm290, %v287, %v289
      %297 = vst [vmem:[#allocation2 + $0x18] sm:$0x70] %v291
      %298 = vst [vmem:[#allocation2 + $0x20] sm:$0x70] %v292
      %299 = vst [vmem:[#allocation2 + $0x28] sm:$0x70] %v293
      %v300 = vld [vmem:[%s170] sm:$0x77]
      %v301 = vld [vmem:[%s170 + $0x8] sm:$0x77]
      %v304 = vcombine.high %v300, %v300
      %v305 = vcombine.high %v301, %v301
      %v306 = vrot.slane %v300, 1
      %v307 = vrot.slane %v304, 1
      %v308 = vrot.slane %v301, 1
      %v309 = vrot.slane %v305, 1
      %310 = vrot.lane.b32.xlu0 %v306, 108
      %v311 = vpop.permute.xlu0 %310
      %312 = vrot.lane.b32.xlu0 %v307, 108
      %v313 = vpop.permute.xlu0 %312
      %314 = vrot.lane.b32.xlu0 %v308, 108
      %v315 = vpop.permute.xlu0 %314
      %316 = vrot.lane.b32.xlu0 %v309, 108
      %v317 = vpop.permute.xlu0 %316
      %vm318 = vcmask 883712
      %v319 = vsel %vm318, %v311, %v313
      %v320 = vsel %vm318, %v313, %v315
      %v321 = vsel %vm318, %v315, %v317
      %325 = vst [vmem:[#allocation2 + $0x18] sm:$0x80] %v319
      %326 = vst [vmem:[#allocation2 + $0x20] sm:$0x80] %v320
      %327 = vst [vmem:[#allocation2 + $0x28] sm:$0x80] %v321
      %328 = vst [vmem:[#allocation2 + $0x30] sm:$0x3] %v319
      %329 = vst [vmem:[#allocation2 + $0x38] sm:$0x3] %v320
      %330 = vst [vmem:[#allocation2 + $0x40] sm:$0x3] %v321
      %v331 = vld [vmem:[%s170] sm:$0x77]
      %v332 = vld [vmem:[%s170 + $0x8] sm:$0x77]
      %v335 = vcombine.high %v331, %v331
      %v336 = vcombine.high %v332, %v332
      %v337 = vrot.slane %v331, 6
      %v338 = vrot.slane %v335, 6
      %v339 = vrot.slane %v332, 6
      %v340 = vrot.slane %v336, 6
      %341 = vrot.lane.b32.xlu0 %v337, 107
      %v342 = vpop.permute.xlu0 %341
      %343 = vrot.lane.b32.xlu0 %v338, 107
      %v344 = vpop.permute.xlu0 %343
      %345 = vrot.lane.b32.xlu0 %v339, 107
      %v346 = vpop.permute.xlu0 %345
      %347 = vrot.lane.b32.xlu0 %v340, 107
      %v348 = vpop.permute.xlu0 %347
      %vm349 = vcmask 875520
      %v350 = vsel %vm349, %v342, %v344
      %v351 = vsel %vm349, %v344, %v346
      %v352 = vsel %vm349, %v346, %v348
      %356 = vst [vmem:[#allocation2 + $0x30] sm:$0x1c] %v350
      %357 = vst [vmem:[#allocation2 + $0x38] sm:$0x1c] %v351
      %358 = vst [vmem:[#allocation2 + $0x40] sm:$0x1c] %v352
      %v359 = vld [vmem:[%s170] sm:$0x77]
      %v360 = vld [vmem:[%s170 + $0x8] sm:$0x77]
      %v363 = vcombine.high %v359, %v359
      %v364 = vcombine.high %v360, %v360
      %v365 = vrot.slane %v359, 3
      %v366 = vrot.slane %v363, 3
      %v367 = vrot.slane %v360, 3
      %v368 = vrot.slane %v364, 3
      %369 = vrot.lane.b32.xlu0 %v365, 106
      %v370 = vpop.permute.xlu0 %369
      %371 = vrot.lane.b32.xlu0 %v366, 106
      %v372 = vpop.permute.xlu0 %371
      %373 = vrot.lane.b32.xlu0 %v367, 106
      %v374 = vpop.permute.xlu0 %373
      %375 = vrot.lane.b32.xlu0 %v368, 106
      %v376 = vpop.permute.xlu0 %375
      %vm377 = vcmask 867328
      %v378 = vsel %vm377, %v370, %v372
      %v379 = vsel %vm377, %v372, %v374
      %v380 = vsel %vm377, %v374, %v376
      %384 = vst [vmem:[#allocation2 + $0x30] sm:$0xe0] %v378
      %385 = vst [vmem:[#allocation2 + $0x38] sm:$0xe0] %v379
      %386 = vst [vmem:[#allocation2 + $0x40] sm:$0xe0] %v380
      %v387 = vld [vmem:[%s170] sm:$0x77]
      %v388 = vld [vmem:[%s170 + $0x8] sm:$0x77]
      %v391 = vcombine.high %v387, %v387
      %v392 = vcombine.high %v388, %v388
      %393 = vrot.lane.b32.xlu0 %v387, 105
      %v394 = vpop.permute.xlu0 %393
      %395 = vrot.lane.b32.xlu0 %v391, 105
      %v396 = vpop.permute.xlu0 %395
      %397 = vrot.lane.b32.xlu0 %v388, 105
      %v398 = vpop.permute.xlu0 %397
      %399 = vrot.lane.b32.xlu0 %v392, 105
      %v400 = vpop.permute.xlu0 %399
      %vm401 = vcmask 859136
      %v402 = vsel %vm401, %v394, %v396
      %v403 = vsel %vm401, %v396, %v398
      %v404 = vsel %vm401, %v398, %v400
      %408 = vst [vmem:[#allocation2 + $0x48] sm:$0x7] %v402
      %409 = vst [vmem:[#allocation2 + $0x50] sm:$0x7] %v403
      %410 = vst [vmem:[#allocation2 + $0x58] sm:$0x7] %v404
      %v411 = vld [vmem:[%s170] sm:$0x77]
      %v412 = vld [vmem:[%s170 + $0x8] sm:$0x77]
      %v415 = vcombine.high %v411, %v411
      %v416 = vcombine.high %v412, %v412
      %v417 = vrot.slane %v411, 5
      %v418 = vrot.slane %v415, 5
      %v419 = vrot.slane %v412, 5
      %v420 = vrot.slane %v416, 5
      %421 = vrot.lane.b32.xlu0 %v417, 104
      %v422 = vpop.permute.xlu0 %421
      %423 = vrot.lane.b32.xlu0 %v418, 104
      %v424 = vpop.permute.xlu0 %423
      %425 = vrot.lane.b32.xlu0 %v419, 104
      %v426 = vpop.permute.xlu0 %425
      %427 = vrot.lane.b32.xlu0 %v420, 104
      %v428 = vpop.permute.xlu0 %427
      %vm429 = vcmask 850944
      %v430 = vsel %vm429, %v422, %v424
      %v431 = vsel %vm429, %v424, %v426
      %v432 = vsel %vm429, %v426, %v428
      %436 = vst [vmem:[#allocation2 + $0x48] sm:$0x38] %v430
      %437 = vst [vmem:[#allocation2 + $0x50] sm:$0x38] %v431
      %438 = vst [vmem:[#allocation2 + $0x58] sm:$0x38] %v432
      %v439 = vld [vmem:[%s170] sm:$0x77]
      %v440 = vld [vmem:[%s170 + $0x8] sm:$0x77]
      %v443 = vcombine.high %v439, %v439
      %v444 = vcombine.high %v440, %v440
      %v445 = vrot.slane %v439, 2
      %v446 = vrot.slane %v443, 2
      %v447 = vrot.slane %v440, 2
      %v448 = vrot.slane %v444, 2
      %449 = vrot.lane.b32.xlu0 %v445, 88
      %v450 = vpop.permute.xlu0 %449
      %451 = vrot.lane.b32.xlu0 %v446, 88
      %v452 = vpop.permute.xlu0 %451
      %453 = vrot.lane.b32.xlu0 %v447, 88
      %v454 = vpop.permute.xlu0 %453
      %455 = vrot.lane.b32.xlu0 %v448, 88
      %v456 = vpop.permute.xlu0 %455
      %vm457 = vcmask 719872
      %v458 = vsel %vm457, %v450, %v452
      %v459 = vsel %vm457, %v452, %v454
      %v460 = vsel %vm457, %v454, %v456
      %464 = vst [vmem:[#allocation2 + $0x48] sm:$0xc0] %v458
      %465 = vst [vmem:[#allocation2 + $0x50] sm:$0xc0] %v459
      %466 = vst [vmem:[#allocation2 + $0x58] sm:$0xc0] %v460
      %467 = vst [vmem:[#allocation2 + $0x60] sm:$0x1] %v458
      %468 = vst [vmem:[#allocation2 + $0x68] sm:$0x1] %v459
      %469 = vst [vmem:[#allocation2 + $0x70] sm:$0x1] %v460
      %v470 = vld [vmem:[%s170] sm:$0x77]
      %v471 = vld [vmem:[%s170 + $0x8] sm:$0x77]
      %v474 = vcombine.high %v470, %v470
      %v475 = vcombine.high %v471, %v471
      %v476 = vrot.slane %v470, 7
      %v477 = vrot.slane %v474, 7
      %v478 = vrot.slane %v471, 7
      %v479 = vrot.slane %v475, 7
      %480 = vrot.lane.b32.xlu0 %v476, 87
      %v481 = vpop.permute.xlu0 %480
      %482 = vrot.lane.b32.xlu0 %v477, 87
      %v483 = vpop.permute.xlu0 %482
      %484 = vrot.lane.b32.xlu0 %v478, 87
      %v485 = vpop.permute.xlu0 %484
      %486 = vrot.lane.b32.xlu0 %v479, 87
      %v487 = vpop.permute.xlu0 %486
      %vm488 = vcmask 711680
      %v489 = vsel %vm488, %v481, %v483
      %v490 = vsel %vm488, %v483, %v485
      %v491 = vsel %vm488, %v485, %v487
      %495 = vst [vmem:[#allocation2 + $0x60] sm:$0xe] %v489
      %496 = vst [vmem:[#allocation2 + $0x68] sm:$0xe] %v490
      %497 = vst [vmem:[#allocation2 + $0x70] sm:$0xe] %v491
      %v498 = vld [vmem:[%s170] sm:$0x77]
      %v499 = vld [vmem:[%s170 + $0x8] sm:$0x77]
      %v502 = vcombine.low %v498, %v498
      %v503 = vcombine.low %v499, %v499
      %504 = vrot.lane.b32.xlu0 %v502, 86
      %v505 = vpop.permute.xlu0 %504
      %506 = vrot.lane.b32.xlu0 %v498, 86
      %v507 = vpop.permute.xlu0 %506
      %508 = vrot.lane.b32.xlu0 %v503, 86
      %v509 = vpop.permute.xlu0 %508
      %510 = vrot.lane.b32.xlu0 %v499, 86
      %v511 = vpop.permute.xlu0 %510
      %vm512 = vcmask 703488
      %v513 = vsel %vm512, %v505, %v507
      %v514 = vsel %vm512, %v507, %v509
      %v515 = vsel %vm512, %v509, %v511
      %519 = vst [vmem:[#allocation2 + $0x60] sm:$0x70] %v513
      %520 = vst [vmem:[#allocation2 + $0x68] sm:$0x70] %v514
      %521 = vst [vmem:[#allocation2 + $0x70] sm:$0x70] %v515
      %v522 = vld [vmem:[%s170] sm:$0x77]
      %v523 = vld [vmem:[%s170 + $0x8] sm:$0x77]
      %v526 = vcombine.high %v522, %v522
      %v527 = vcombine.high %v523, %v523
      %v528 = vrot.slane %v522, 1
      %v529 = vrot.slane %v526, 1
      %v530 = vrot.slane %v523, 1
      %v531 = vrot.slane %v527, 1
      %532 = vrot.lane.b32.xlu0 %v528, 85
      %v533 = vpop.permute.xlu0 %532
      %534 = vrot.lane.b32.xlu0 %v529, 85
      %v535 = vpop.permute.xlu0 %534
      %536 = vrot.lane.b32.xlu0 %v530, 85
      %v537 = vpop.permute.xlu0 %536
      %538 = vrot.lane.b32.xlu0 %v531, 85
      %v539 = vpop.permute.xlu0 %538
      %vm540 = vcmask 695296
      %v541 = vsel %vm540, %v533, %v535
      %v542 = vsel %vm540, %v535, %v537
      %v543 = vsel %vm540, %v537, %v539
      %547 = vst [vmem:[#allocation2 + $0x60] sm:$0x80] %v541
      %548 = vst [vmem:[#allocation2 + $0x68] sm:$0x80] %v542
      %549 = vst [vmem:[#allocation2 + $0x70] sm:$0x80] %v543
      %550 = vst [vmem:[#allocation2 + $0x78] sm:$0x3] %v541
      %551 = vst [vmem:[#allocation2 + $0x80] sm:$0x3] %v542
      %552 = vst [vmem:[#allocation2 + $0x88] sm:$0x3] %v543
      %v553 = vld [vmem:[%s170] sm:$0x77]
      %v554 = vld [vmem:[%s170 + $0x8] sm:$0x77]
      %v557 = vcombine.high %v553, %v553
      %v558 = vcombine.high %v554, %v554
      %v559 = vrot.slane %v553, 6
      %v560 = vrot.slane %v557, 6
      %v561 = vrot.slane %v554, 6
      %v562 = vrot.slane %v558, 6
      %563 = vrot.lane.b32.xlu0 %v559, 84
      %v564 = vpop.permute.xlu0 %563
      %565 = vrot.lane.b32.xlu0 %v560, 84
      %v566 = vpop.permute.xlu0 %565
      %567 = vrot.lane.b32.xlu0 %v561, 84
      %v568 = vpop.permute.xlu0 %567
      %569 = vrot.lane.b32.xlu0 %v562, 84
      %v570 = vpop.permute.xlu0 %569
      %vm571 = vcmask 687104
      %v572 = vsel %vm571, %v564, %v566
      %v573 = vsel %vm571, %v566, %v568
      %v574 = vsel %vm571, %v568, %v570
      %578 = vst [vmem:[#allocation2 + $0x78] sm:$0x1c] %v572
      %579 = vst [vmem:[#allocation2 + $0x80] sm:$0x1c] %v573
      %580 = vst [vmem:[#allocation2 + $0x88] sm:$0x1c] %v574
      %v581 = vld [vmem:[%s170] sm:$0x77]
      %v582 = vld [vmem:[%s170 + $0x8] sm:$0x77]
      %v585 = vcombine.high %v581, %v581
      %v586 = vcombine.high %v582, %v582
      %v587 = vrot.slane %v581, 3
      %v588 = vrot.slane %v585, 3
      %v589 = vrot.slane %v582, 3
      %v590 = vrot.slane %v586, 3
      %591 = vrot.lane.b32.xlu0 %v587, 68
      %v592 = vpop.permute.xlu0 %591
      %593 = vrot.lane.b32.xlu0 %v588, 68
      %v594 = vpop.permute.xlu0 %593
      %595 = vrot.lane.b32.xlu0 %v589, 68
      %v596 = vpop.permute.xlu0 %595
      %597 = vrot.lane.b32.xlu0 %v590, 68
      %v598 = vpop.permute.xlu0 %597
      %vm599 = vcmask 556032
      %v600 = vsel %vm599, %v592, %v594
      %v601 = vsel %vm599, %v594, %v596
      %v602 = vsel %vm599, %v596, %v598
      %606 = vst [vmem:[#allocation2 + $0x78] sm:$0xe0] %v600
      %607 = vst [vmem:[#allocation2 + $0x80] sm:$0xe0] %v601
      %608 = vst [vmem:[#allocation2 + $0x88] sm:$0xe0] %v602
      %v609 = vld [vmem:[%s170] sm:$0x77]
      %v610 = vld [vmem:[%s170 + $0x8] sm:$0x77]
      %v613 = vcombine.high %v609, %v609
      %v614 = vcombine.high %v610, %v610
      %615 = vrot.lane.b32.xlu0 %v609, 67
      %v616 = vpop.permute.xlu0 %615
      %617 = vrot.lane.b32.xlu0 %v613, 67
      %v618 = vpop.permute.xlu0 %617
      %619 = vrot.lane.b32.xlu0 %v610, 67
      %v620 = vpop.permute.xlu0 %619
      %621 = vrot.lane.b32.xlu0 %v614, 67
      %v622 = vpop.permute.xlu0 %621
      %vm623 = vcmask 547840
      %v624 = vsel %vm623, %v616, %v618
      %v625 = vsel %vm623, %v618, %v620
      %v626 = vsel %vm623, %v620, %v622
      %630 = vst [vmem:[#allocation2 + $0x90] sm:$0x7] %v624
      %631 = vst [vmem:[#allocation2 + $0x98] sm:$0x7] %v625
      %632 = vst [vmem:[#allocation2 + $0xa0] sm:$0x7] %v626
      %v633 = vld [vmem:[%s170] sm:$0x77]
      %v634 = vld [vmem:[%s170 + $0x8] sm:$0x77]
      %v637 = vcombine.high %v633, %v633
      %v638 = vcombine.high %v634, %v634
      %v639 = vrot.slane %v633, 5
      %v640 = vrot.slane %v637, 5
      %v641 = vrot.slane %v634, 5
      %v642 = vrot.slane %v638, 5
      %643 = vrot.lane.b32.xlu0 %v639, 66
      %v644 = vpop.permute.xlu0 %643
      %645 = vrot.lane.b32.xlu0 %v640, 66
      %v646 = vpop.permute.xlu0 %645
      %647 = vrot.lane.b32.xlu0 %v641, 66
      %v648 = vpop.permute.xlu0 %647
      %649 = vrot.lane.b32.xlu0 %v642, 66
      %v650 = vpop.permute.xlu0 %649
      %vm651 = vcmask 539648
      %v652 = vsel %vm651, %v644, %v646
      %v653 = vsel %vm651, %v646, %v648
      %v654 = vsel %vm651, %v648, %v650
      %658 = vst [vmem:[#allocation2 + $0x90] sm:$0x38] %v652
      %659 = vst [vmem:[#allocation2 + $0x98] sm:$0x38] %v653
      %660 = vst [vmem:[#allocation2 + $0xa0] sm:$0x38] %v654
      %v661 = vld [vmem:[%s170] sm:$0x77]
      %v662 = vld [vmem:[%s170 + $0x8] sm:$0x77]
      %v665 = vcombine.high %v661, %v661
      %v666 = vcombine.high %v662, %v662
      %v667 = vrot.slane %v661, 2
      %v668 = vrot.slane %v665, 2
      %v669 = vrot.slane %v662, 2
      %v670 = vrot.slane %v666, 2
      %671 = vrot.lane.b32.xlu0 %v667, 65
      %v672 = vpop.permute.xlu0 %671
      %673 = vrot.lane.b32.xlu0 %v668, 65
      %v674 = vpop.permute.xlu0 %673
      %675 = vrot.lane.b32.xlu0 %v669, 65
      %v676 = vpop.permute.xlu0 %675
      %677 = vrot.lane.b32.xlu0 %v670, 65
      %v678 = vpop.permute.xlu0 %677
      %vm679 = vcmask 531456
      %v680 = vsel %vm679, %v672, %v674
      %v681 = vsel %vm679, %v674, %v676
      %v682 = vsel %vm679, %v676, %v678
      %686 = vst [vmem:[#allocation2 + $0x90] sm:$0xc0] %v680
      %687 = vst [vmem:[#allocation2 + $0x98] sm:$0xc0] %v681
      %688 = vst [vmem:[#allocation2 + $0xa0] sm:$0xc0] %v682
      %689 = vst [vmem:[#allocation2 + $0xa8] sm:$0x1] %v680
      %690 = vst [vmem:[#allocation2 + $0xb0] sm:$0x1] %v681
      %691 = vst [vmem:[#allocation2 + $0xb8] sm:$0x1] %v682
      %v692 = vld [vmem:[%s170] sm:$0x77]
      %v693 = vld [vmem:[%s170 + $0x8] sm:$0x77]
      %v696 = vcombine.high %v692, %v692
      %v697 = vcombine.high %v693, %v693
      %v698 = vrot.slane %v692, 7
      %v699 = vrot.slane %v696, 7
      %v700 = vrot.slane %v693, 7
      %v701 = vrot.slane %v697, 7
      %702 = vrot.lane.b32.xlu0 %v698, 64
      %v703 = vpop.permute.xlu0 %702
      %704 = vrot.lane.b32.xlu0 %v699, 64
      %v705 = vpop.permute.xlu0 %704
      %706 = vrot.lane.b32.xlu0 %v700, 64
      %v707 = vpop.permute.xlu0 %706
      %708 = vrot.lane.b32.xlu0 %v701, 64
      %v709 = vpop.permute.xlu0 %708
      %vm710 = vcmask 523264
      %v711 = vsel %vm710, %v703, %v705
      %v712 = vsel %vm710, %v705, %v707
      %v713 = vsel %vm710, %v707, %v709
      %717 = vst [vmem:[#allocation2 + $0xa8] sm:$0xe] %v711
      %718 = vst [vmem:[#allocation2 + $0xb0] sm:$0xe] %v712
      %719 = vst [vmem:[#allocation2 + $0xb8] sm:$0xe] %v713
      %v720 = vld [vmem:[%s170] sm:$0x77]
      %v721 = vld [vmem:[%s170 + $0x8] sm:$0x77]
      %v724 = vcombine.low %v720, %v720
      %v725 = vcombine.low %v721, %v721
      %726 = vrot.lane.b32.xlu0 %v724, 48
      %v727 = vpop.permute.xlu0 %726
      %728 = vrot.lane.b32.xlu0 %v720, 48
      %v729 = vpop.permute.xlu0 %728
      %730 = vrot.lane.b32.xlu0 %v725, 48
      %v731 = vpop.permute.xlu0 %730
      %732 = vrot.lane.b32.xlu0 %v721, 48
      %v733 = vpop.permute.xlu0 %732
      %vm734 = vcmask 392192
      %v735 = vsel %vm734, %v727, %v729
      %v736 = vsel %vm734, %v729, %v731
      %v737 = vsel %vm734, %v731, %v733
      %741 = vst [vmem:[#allocation2 + $0xa8] sm:$0x70] %v735
      %742 = vst [vmem:[#allocation2 + $0xb0] sm:$0x70] %v736
      %743 = vst [vmem:[#allocation2 + $0xb8] sm:$0x70] %v737
      %v744 = vld [vmem:[%s170] sm:$0x77]
      %v745 = vld [vmem:[%s170 + $0x8] sm:$0x77]
      %v748 = vcombine.high %v744, %v744
      %v749 = vcombine.high %v745, %v745
      %v750 = vrot.slane %v744, 1
      %v751 = vrot.slane %v748, 1
      %v752 = vrot.slane %v745, 1
      %v753 = vrot.slane %v749, 1
      %754 = vrot.lane.b32.xlu0 %v750, 47
      %v755 = vpop.permute.xlu0 %754
      %756 = vrot.lane.b32.xlu0 %v751, 47
      %v757 = vpop.permute.xlu0 %756
      %758 = vrot.lane.b32.xlu0 %v752, 47
      %v759 = vpop.permute.xlu0 %758
      %760 = vrot.lane.b32.xlu0 %v753, 47
      %v761 = vpop.permute.xlu0 %760
      %vm762 = vcmask 384000
      %v763 = vsel %vm762, %v755, %v757
      %v764 = vsel %vm762, %v757, %v759
      %v765 = vsel %vm762, %v759, %v761
      %769 = vst [vmem:[#allocation2 + $0xa8] sm:$0x80] %v763
      %770 = vst [vmem:[#allocation2 + $0xb0] sm:$0x80] %v764
      %771 = vst [vmem:[#allocation2 + $0xb8] sm:$0x80] %v765
      %772 = vst [vmem:[#allocation2 + $0xc0] sm:$0x3] %v763
      %773 = vst [vmem:[#allocation2 + $0xc8] sm:$0x3] %v764
      %774 = vst [vmem:[#allocation2 + $0xd0] sm:$0x3] %v765
      %v775 = vld [vmem:[%s170] sm:$0x77]
      %v776 = vld [vmem:[%s170 + $0x8] sm:$0x77]
      %v779 = vcombine.high %v775, %v775
      %v780 = vcombine.high %v776, %v776
      %v781 = vrot.slane %v775, 6
      %v782 = vrot.slane %v779, 6
      %v783 = vrot.slane %v776, 6
      %v784 = vrot.slane %v780, 6
      %785 = vrot.lane.b32.xlu0 %v781, 46
      %v786 = vpop.permute.xlu0 %785
      %787 = vrot.lane.b32.xlu0 %v782, 46
      %v788 = vpop.permute.xlu0 %787
      %789 = vrot.lane.b32.xlu0 %v783, 46
      %v790 = vpop.permute.xlu0 %789
      %791 = vrot.lane.b32.xlu0 %v784, 46
      %v792 = vpop.permute.xlu0 %791
      %vm793 = vcmask 375808
      %v794 = vsel %vm793, %v786, %v788
      %v795 = vsel %vm793, %v788, %v790
      %v796 = vsel %vm793, %v790, %v792
      %800 = vst [vmem:[#allocation2 + $0xc0] sm:$0x1c] %v794
      %801 = vst [vmem:[#allocation2 + $0xc8] sm:$0x1c] %v795
      %802 = vst [vmem:[#allocation2 + $0xd0] sm:$0x1c] %v796
      %v803 = vld [vmem:[%s170] sm:$0x77]
      %v804 = vld [vmem:[%s170 + $0x8] sm:$0x77]
      %v807 = vcombine.high %v803, %v803
      %v808 = vcombine.high %v804, %v804
      %v809 = vrot.slane %v803, 3
      %v810 = vrot.slane %v807, 3
      %v811 = vrot.slane %v804, 3
      %v812 = vrot.slane %v808, 3
      %813 = vrot.lane.b32.xlu0 %v809, 45
      %v814 = vpop.permute.xlu0 %813
      %815 = vrot.lane.b32.xlu0 %v810, 45
      %v816 = vpop.permute.xlu0 %815
      %817 = vrot.lane.b32.xlu0 %v811, 45
      %v818 = vpop.permute.xlu0 %817
      %819 = vrot.lane.b32.xlu0 %v812, 45
      %v820 = vpop.permute.xlu0 %819
      %vm821 = vcmask 367616
      %v822 = vsel %vm821, %v814, %v816
      %v823 = vsel %vm821, %v816, %v818
      %v824 = vsel %vm821, %v818, %v820
      %828 = vst [vmem:[#allocation2 + $0xc0] sm:$0xe0] %v822
      %829 = vst [vmem:[#allocation2 + $0xc8] sm:$0xe0] %v823
      %830 = vst [vmem:[#allocation2 + $0xd0] sm:$0xe0] %v824
      %v831 = vld [vmem:[%s170] sm:$0x77]
      %v832 = vld [vmem:[%s170 + $0x8] sm:$0x77]
      %v835 = vcombine.high %v831, %v831
      %v836 = vcombine.high %v832, %v832
      %837 = vrot.lane.b32.xlu0 %v831, 44
      %v838 = vpop.permute.xlu0 %837
      %839 = vrot.lane.b32.xlu0 %v835, 44
      %v840 = vpop.permute.xlu0 %839
      %841 = vrot.lane.b32.xlu0 %v832, 44
      %v842 = vpop.permute.xlu0 %841
      %843 = vrot.lane.b32.xlu0 %v836, 44
      %v844 = vpop.permute.xlu0 %843
      %vm845 = vcmask 359424
      %v846 = vsel %vm845, %v838, %v840
      %v847 = vsel %vm845, %v840, %v842
      %v848 = vsel %vm845, %v842, %v844
      %852 = vst [vmem:[#allocation2 + $0xd8] sm:$0x7] %v846
      %853 = vst [vmem:[#allocation2 + $0xe0] sm:$0x7] %v847
      %854 = vst [vmem:[#allocation2 + $0xe8] sm:$0x7] %v848
      %v855 = vlaneseq
      %vm856 = vcmp.ge.s32.totalorder %v855, 0
      %vm857 = vcmp.lt.s32.totalorder %v855, 384
      %vm858 = vmand %vm856, %vm857
      %s859 = scalar_lea.vmem [#allocation2], 219
      %860 = vst.msk [vmem:[%s859] ss:$8 sm:$0x7] %vm858, 1.0
      %861 = vst.msk [vmem:[%s859] ss:$8 sm:$0x0] %vm858, 1.0
      %862 = vst [vmem:[#allocation2 + $0xd8] sm:$0xf0] 0.0
      %863 = vst [vmem:[#allocation2 + $0xe0] sm:$0xf0] 0.0
      %864 = vst [vmem:[#allocation2 + $0xe8] sm:$0xf0] 0.0
      %v865 = vld [vmem:[%s0] sm:$0xff]
      %v866 = vld [vmem:[%s0 + $0x8] sm:$0xff]
      %v867 = vld [vmem:[%s0 + $0x10] sm:$0xff]
      %v868 = vld [vmem:[%s0 + $0x18] sm:$0xff]
      %v869 = vld [vmem:[#allocation2] sm:$0xff]
      %v870 = vld [vmem:[#allocation2 + $0x8] sm:$0xff]
      %v871 = vld [vmem:[#allocation2 + $0x10] sm:$0xff]
      %v872 = vld [vmem:[#allocation2 + $0x18] sm:$0xff]
      %v873 = vld [vmem:[#allocation2 + $0x20] sm:$0xff]
      %v874 = vld [vmem:[#allocation2 + $0x28] sm:$0xff]
      %v875 = vld [vmem:[#allocation2 + $0x30] sm:$0xff]
      %v876 = vld [vmem:[#allocation2 + $0x38] sm:$0xff]
      %v877 = vld [vmem:[#allocation2 + $0x40] sm:$0xff]
      %v878 = vld [vmem:[#allocation2 + $0x48] sm:$0xff]
      %v879 = vld [vmem:[#allocation2 + $0x50] sm:$0xff]
      %v880 = vld [vmem:[#allocation2 + $0x58] sm:$0xff]
      %v881 = vld [vmem:[#allocation2 + $0x60] sm:$0xff]
      %v882 = vld [vmem:[#allocation2 + $0x68] sm:$0xff]
      %v883 = vld [vmem:[#allocation2 + $0x70] sm:$0xff]
      %v884 = vld [vmem:[#allocation2 + $0x78] sm:$0xff]
      %v885 = vld [vmem:[#allocation2 + $0x80] sm:$0xff]
      %v886 = vld [vmem:[#allocation2 + $0x88] sm:$0xff]
      %v887 = vld [vmem:[#allocation2 + $0x90] sm:$0xff]
      %v888 = vld [vmem:[#allocation2 + $0x98] sm:$0xff]
      %v889 = vld [vmem:[#allocation2 + $0xa0] sm:$0xff]
      %v890 = vld [vmem:[#allocation2 + $0xa8] sm:$0xff]
      %v891 = vld [vmem:[#allocation2 + $0xb0] sm:$0xff]
      %v892 = vld [vmem:[#allocation2 + $0xb8] sm:$0xff]
      %v893 = vld [vmem:[#allocation2 + $0xc0] sm:$0xff]
      %v894 = vld [vmem:[#allocation2 + $0xc8] sm:$0xff]
      %v895 = vld [vmem:[#allocation2 + $0xd0] sm:$0xff]
      %v896 = vld [vmem:[#allocation2 + $0xd8] sm:$0xff]
      %v897 = vld [vmem:[#allocation2 + $0xe0] sm:$0xff]
      %v898 = vld [vmem:[#allocation2 + $0xe8] sm:$0xff]
      %vm899 = vcmask 654336
      %v901 = vsel %vm899, %v865, 0
      %v904 = vsel %vm899, %v866, 0
      %v907 = vsel %vm899, %v867, 0
      %v910 = vsel %vm899, %v868, 0
      %912 = vmatprep.subr.mxu0 %v870
      %913 = vmatpush1.msra.mxu0 %v869
      %914 = vmatprep.subr.mxu0 %v873
      %915 = vmatpush1.msra.mxu0 %v872
      %916 = vmatprep.subr.mxu0 %v876
      %917 = vmatpush1.msra.mxu0 %v875
      %918 = vmatprep.subr.mxu0 %v879
      %919 = vmatpush1.msra.mxu0 %v878
      %920 = vmatprep.subr.mxu0 %v882
      %921 = vmatpush1.msra.mxu0 %v881
      %922 = vmatprep.subr.mxu0 %v885
      %923 = vmatpush1.msra.mxu0 %v884
      %924 = vmatprep.subr.mxu0 %v888
      %925 = vmatpush1.msra.mxu0 %v887
      %926 = vmatprep.subr.mxu0 %v891
      %927 = vmatpush1.msra.mxu0 %v890
      %928 = vmatprep.subr.mxu0 %v894
      %929 = vmatpush1.msra.mxu0 %v893
      %930 = vmatprep.subr.mxu0 %v897
      %931 = vmatpush1.msra.mxu0 %v896
      %932 = vmatprep.subr.mxu0 0.0
      %933 = vmatpush1.msra.mxu0 0.0
      %934 = vmatprep.subr.mxu0 0.0
      %935 = vmatpush1.msra.mxu0 0.0
      %936 = vmatprep.subr.mxu0 0.0
      %937 = vmatpush1.msra.mxu0 0.0
      %938 = vmatprep.subr.mxu0 0.0
      %939 = vmatpush1.msra.mxu0 0.0
      %940 = vmatprep.subr.mxu0 0.0
      %941 = vmatpush1.msra.mxu0 0.0
      %942 = vmatprep.subr.mxu0 0.0
      %943 = vmatpush1.msra.mxu0 0.0
      %944 = vmatprep.subr.mxu0 0.0
      %945 = vmatpush1.msra.mxu0 0.0
      %946 = vmatprep.subr.mxu0 0.0
      %947 = vmatpush1.msra.mxu0 0.0
      %948 = vmatprep.subr.mxu0 0.0
      %949 = vmatpush1.msra.mxu0 0.0
      %950 = vmatprep.subr.mxu0 0.0
      %951 = vmatpush1.msra.mxu0 0.0
      %952 = vmatprep.subr.mxu0 0.0
      %953 = vmatpush1.msra.mxu0 0.0
      %954 = vmatprep.subr.mxu0 0.0
      %955 = vmatpush1.msra.mxu0 0.0
      %956 = vmatprep.subr.mxu0 0.0
      %957 = vmatpush1.msra.mxu0 0.0
      %958 = vmatprep.subr.mxu0 0.0
      %959 = vmatpush1.msra.mxu0 0.0
      %960 = vmatprep.subr.mxu0 0.0
      %961 = vmatpush1.msra.mxu0 0.0
      %962 = vmatprep.subr.mxu0 0.0
      %963 = vmatpush1.msra.mxu0 0.0
      %964 = vmatprep.subr.mxu0 0.0
      %965 = vmatpush1.msra.mxu0 0.0
      %966 = vmatprep.subr.mxu0 0.0
      %967 = vmatpush1.msra.mxu0 0.0
      %968 = vmatprep.subr.mxu0 0.0
      %969 = vmatpush1.msra.mxu0 0.0
      %970 = vmatprep.subr.mxu0 0.0
      %971 = vmatpush1.msra.mxu0 0.0
      %972 = vmatprep.subr.mxu0 0.0
      %973 = vmatpush1.msra.mxu0 0.0
      %974 = vmatprep.subr.mxu0 0.0
      %975 = vmatpush1.msra.mxu0 0.0
      %976 = vmatprep.mubr.f32.mxu0 0.0
      %977 = vmatmul.mubr.f32.gmra.mrb[0].mxu0 %v901
      %v978 = vpop.f32.mrb[0].mxu0
      %v979 = vadd.f32 0.0, %v978
      %v980 = vpop.f32.mrb[0].mxu0
      %v981 = vadd.f32 0.0, %v980
      %982 = vmatprep.mubr.f32.mxu0 0.0
      %983 = vmatmul.mubr.f32.gmra.mrb[0].mxu0 %v904
      %v984 = vpop.f32.mrb[0].mxu0
      %v985 = vadd.f32 0.0, %v984
      %v986 = vpop.f32.mrb[0].mxu0
      %v987 = vadd.f32 0.0, %v986
      %988 = vmatprep.mubr.f32.mxu0 0.0
      %989 = vmatmul.mubr.f32.gmra.mrb[0].mxu0 %v907
      %v990 = vpop.f32.mrb[0].mxu0
      %v991 = vadd.f32 0.0, %v990
      %v992 = vpop.f32.mrb[0].mxu0
      %v993 = vadd.f32 0.0, %v992
      %994 = vmatprep.mubr.f32.mxu0 0.0
      %995 = vmatmul.mubr.f32.gmra.mrb[0].mxu0 %v910
      %v996 = vpop.f32.mrb[0].mxu0
      %v997 = vadd.f32 0.0, %v996
      %v998 = vpop.f32.mrb[0].mxu0
      %v999 = vadd.f32 0.0, %v998
      %1000 = vdwg.mxu0
      %1001 = vmatprep.subr.mxu0 0.0
      %1002 = vmatpush1.msra.mxu0 %v871
      %1003 = vmatprep.subr.mxu0 0.0
      %1004 = vmatpush1.msra.mxu0 %v874
      %1005 = vmatprep.subr.mxu0 0.0
      %1006 = vmatpush1.msra.mxu0 %v877
      %1007 = vmatprep.subr.mxu0 0.0
      %1008 = vmatpush1.msra.mxu0 %v880
      %1009 = vmatprep.subr.mxu0 0.0
      %1010 = vmatpush1.msra.mxu0 %v883
      %1011 = vmatprep.subr.mxu0 0.0
      %1012 = vmatpush1.msra.mxu0 %v886
      %1013 = vmatprep.subr.mxu0 0.0
      %1014 = vmatpush1.msra.mxu0 %v889
      %1015 = vmatprep.subr.mxu0 0.0
      %1016 = vmatpush1.msra.mxu0 %v892
      %1017 = vmatprep.subr.mxu0 0.0
      %1018 = vmatpush1.msra.mxu0 %v895
      %1019 = vmatprep.subr.mxu0 0.0
      %1020 = vmatpush1.msra.mxu0 %v898
      %1021 = vmatprep.subr.mxu0 0.0
      %1022 = vmatpush1.msra.mxu0 0.0
      %1023 = vmatprep.subr.mxu0 0.0
      %1024 = vmatpush1.msra.mxu0 0.0
      %1025 = vmatprep.subr.mxu0 0.0
      %1026 = vmatpush1.msra.mxu0 0.0
      %1027 = vmatprep.subr.mxu0 0.0
      %1028 = vmatpush1.msra.mxu0 0.0
      %1029 = vmatprep.subr.mxu0 0.0
      %1030 = vmatpush1.msra.mxu0 0.0
      %1031 = vmatprep.subr.mxu0 0.0
      %1032 = vmatpush1.msra.mxu0 0.0
      %1033 = vmatprep.subr.mxu0 0.0
      %1034 = vmatpush1.msra.mxu0 0.0
      %1035 = vmatprep.subr.mxu0 0.0
      %1036 = vmatpush1.msra.mxu0 0.0
      %1037 = vmatprep.subr.mxu0 0.0
      %1038 = vmatpush1.msra.mxu0 0.0
      %1039 = vmatprep.subr.mxu0 0.0
      %1040 = vmatpush1.msra.mxu0 0.0
      %1041 = vmatprep.subr.mxu0 0.0
      %1042 = vmatpush1.msra.mxu0 0.0
      %1043 = vmatprep.subr.mxu0 0.0
      %1044 = vmatpush1.msra.mxu0 0.0
      %1045 = vmatprep.subr.mxu0 0.0
      %1046 = vmatpush1.msra.mxu0 0.0
      %1047 = vmatprep.subr.mxu0 0.0
      %1048 = vmatpush1.msra.mxu0 0.0
      %1049 = vmatprep.subr.mxu0 0.0
      %1050 = vmatpush1.msra.mxu0 0.0
      %1051 = vmatprep.subr.mxu0 0.0
      %1052 = vmatpush1.msra.mxu0 0.0
      %1053 = vmatprep.subr.mxu0 0.0
      %1054 = vmatpush1.msra.mxu0 0.0
      %1055 = vmatprep.subr.mxu0 0.0
      %1056 = vmatpush1.msra.mxu0 0.0
      %1057 = vmatprep.subr.mxu0 0.0
      %1058 = vmatpush1.msra.mxu0 0.0
      %1059 = vmatprep.subr.mxu0 0.0
      %1060 = vmatpush1.msra.mxu0 0.0
      %1061 = vmatprep.subr.mxu0 0.0
      %1062 = vmatpush1.msra.mxu0 0.0
      %1063 = vmatprep.subr.mxu0 0.0
      %1064 = vmatpush1.msra.mxu0 0.0
      %1065 = vmatprep.mubr.f32.mxu0 0.0
      %1066 = vmatmul.mubr.f32.gmra.mrb[0].mxu0 %v901
      %v1067 = vpop.f32.mrb[0].mxu0
      %v1068 = vadd.f32 0.0, %v1067
      %v1069 = vpop.f32.mrb[0].mxu0
      %1070 = vmatprep.mubr.f32.mxu0 0.0
      %1071 = vmatmul.mubr.f32.gmra.mrb[0].mxu0 %v904
      %v1072 = vpop.f32.mrb[0].mxu0
      %v1073 = vadd.f32 0.0, %v1072
      %v1074 = vpop.f32.mrb[0].mxu0
      %1075 = vmatprep.mubr.f32.mxu0 0.0
      %1076 = vmatmul.mubr.f32.gmra.mrb[0].mxu0 %v907
      %v1077 = vpop.f32.mrb[0].mxu0
      %v1078 = vadd.f32 0.0, %v1077
      %v1079 = vpop.f32.mrb[0].mxu0
      %1080 = vmatprep.mubr.f32.mxu0 0.0
      %1081 = vmatmul.mubr.f32.gmra.mrb[0].mxu0 %v910
      %v1082 = vpop.f32.mrb[0].mxu0
      %v1083 = vadd.f32 0.0, %v1082
      %v1084 = vpop.f32.mrb[0].mxu0
      %1085 = vdwg.mxu0
      %1086 = vst [vmem:[%s179] sm:$0xff] %v979
      %1087 = vst [vmem:[%s179 + $0x8] sm:$0xff] %v981
      %1088 = vst [vmem:[%s179 + $0x10] sm:$0xff] %v1068
      %1089 = vst [vmem:[%s179 + $0x18] sm:$0xff] %v985
      %1090 = vst [vmem:[%s179 + $0x20] sm:$0xff] %v987
      %1091 = vst [vmem:[%s179 + $0x28] sm:$0xff] %v1073
      %1092 = vst [vmem:[%s179 + $0x30] sm:$0xff] %v991
      %1093 = vst [vmem:[%s179 + $0x38] sm:$0xff] %v993
      %1094 = vst [vmem:[%s179 + $0x40] sm:$0xff] %v1078
      %1095 = vst [vmem:[%s179 + $0x48] sm:$0xff] %v997
      %1096 = vst [vmem:[%s179 + $0x50] sm:$0xff] %v999
      %1097 = vst [vmem:[%s179 + $0x58] sm:$0xff] %v1083
      %s1098 = smul.u32 3, %s18
      %p1099 = scmp.lt.s32.totalorder %s17, 1
      %s1100 = scalar_select %p1099, %s17, 1
      %p1101 = scmp.lt.s32.totalorder %s1098, 2
      %s1102 = scalar_select %p1101, %s1098, 2
      %s1103 = smul.addr %s1100, 12
      %s1104 = sadd.s32 %s1102, %s1103
      %s1105 = smul.addr %s1104, 8
      %s1106 = scalar_lea.vmem %s2, %s1105
      // Predicated region
      $region29: #{conv2d_pallas.1} parent=27 // pred_check
        %p1107 = pneg %p94
      $region30: #{conv2d_pallas.1} parent=27 // pred_check_branch
        %1109 = sbr.rel (%p1107) target = $region32
      $region31: #{conv2d_pallas.1} parent=27 // pred_region
        %s1110 = smul.u32 3, %s18
      $region32: #{conv2d_pallas.1} parent=27 // pred_fallthru
        _
    $region28: #{conv2d_pallas.1} parent=5 // pred_fallthru
      _
    %p1111 = scmp.le.s32.totalorder 2, %s8
    // Predicated region
    $region33: #{conv2d_pallas.1} parent=5 // pred_check
      %p1112 = pneg %p1111
    $region34: #{conv2d_pallas.1} parent=5 // pred_check_branch
      %1114 = sbr.rel (%p1112) target = $region36
    $region35: #{conv2d_pallas.1} parent=5 // pred_region
      %s1115 = ssub.s32 %s8, 2
      // Predicated region
      $region37: #{conv2d_pallas.1} parent=35 // pred_check
        %p1116 = pneg %p100
      $region38: #{conv2d_pallas.1} parent=35 // pred_check_branch
        %1118 = sbr.rel (%p1116) target = $region40
      $region39: #{conv2d_pallas.1} parent=35 // pred_region
        %s1119 = smul.u32 3, %s20
        %p1120 = scmp.lt.s32.totalorder %s19, 1
        %s1121 = scalar_select %p1120, %s19, 1
        %p1122 = scmp.lt.s32.totalorder %s1119, 2
        %s1123 = scalar_select %p1122, %s1119, 2
        %s1124 = smul.addr %s1121, 12
        %s1125 = sadd.s32 %s1123, %s1124
        %s1126 = smul.addr %s1125, 8
        %s1127 = scalar_lea.vmem %s2, %s1126
      $region40: #{conv2d_pallas.1} parent=35 // pred_fallthru
        _
    $region36: #{conv2d_pallas.1} parent=5 // pred_fallthru
      _
  $region6: #{conv2d_pallas.1} parent=0 // loop_footer
    %s12 = sadd.s32 1, %s8
  $region7: #{conv2d_pallas.1} parent=0 // loop_footer_branch
    %7 = sbr.rel target = $region3
  $region8: #{conv2d_pallas.1} parent=0 // loop_exit
    _

</llo_original>
